<compile_context>
chip_gen: v6e
topology: v6e:2x2x1
jax: 0.10.0
libtpu: 0.0.40
codegen_flags: <defaults>
</compile_context>

<pallas_src>
import jax
import jax.numpy as jnp
from jax.experimental import pallas as pl
from jax.experimental.pallas import tpu as pltpu

EPS = 1e-5  # PyTorch BatchNorm2d default eps


# ------------------------------ small helpers -------------------------------

def _round_up(x, m):
    return (x + m - 1) // m * m


def _vmem_capacity_bytes():
    try:
        cap = getattr(pltpu.get_tpu_info(), "vmem_capacity_bytes", None)
        if cap:
            return int(cap)
    except Exception:
        pass
    return 64 * 1024 * 1024          # conservative default (v7x per-TC VMEM)


_VMEM_CAP = _vmem_capacity_bytes()
_VMEM_LIMIT = min(int(_VMEM_CAP * 0.70), 100 * 1024 * 1024)   # per-generation
_VMEM_BUDGET = int(_VMEM_CAP * 0.45)                          # for tile sizing


def _compiler_params(dim_sem):
    return pltpu.CompilerParams(dimension_semantics=dim_sem,
                                vmem_limit_bytes=_VMEM_LIMIT)


def _pad2d(x, rows, cols):
    r, c = x.shape
    if r == rows and c == cols:
        return x
    return jnp.pad(x, ((0, rows - r), (0, cols - c)))


def _pick_tile_m(m, target):
    """M tile: close to `target`, multiple of 8, preferring a divisor of m so
    no M padding/slicing glue is needed; keep >= 2 blocks for large m so both
    v7x TensorCores get work on the 'parallel' axis."""
    if m >= 1024:
        target = min(target, _round_up((m + 1) // 2, 8))
    tm = min(max(target, 8), _round_up(m, 8))
    tm = max(8, tm - tm % 8)
    if m % 8 == 0:
        for cand in range(tm, max(tm // 2, 8) - 1, -8):
            if m % cand == 0:
                return cand
    return tm


def _pick_tile_m_matmul(m, kp, np_, *, out_bytes, residual, shortcut_cp):
    """Largest M tile that keeps resident weights + double-buffered A/out/res
    tiles inside the per-generation VMEM budget."""
    fixed = 2 * kp * np_ * 2                         # resident 3x3 weights
    per_row = 2 * kp * 2 + 2 * np_ * out_bytes       # A tile (bf16) + output
    if residual:
        per_row += 2 * np_ * 2                       # bf16 residual tile
    if shortcut_cp:
        fixed += 2 * shortcut_cp * np_ * 2           # resident 1x1 weights
        per_row += 2 * np_ * 2                       # bf16 shortcut output
    target = max(128, (_VMEM_BUDGET - fixed) // max(per_row, 1))
    return _pick_tile_m(m, min(target, 1024))


def _pick_tile_m_elementwise(m, cp):
    per_row = 2 * 2 * cp * 2 + 64                    # dbl-buffered bf16 in+out
    target = min(4096, max(512, _VMEM_BUDGET // max(per_row, 1)))
    return _pick_tile_m(m, target)


def _stats_slab(s, q):
    """Pack per-channel sum (row 0) and sumsq (row 1) into an (8, C) slab so
    per-tile stats outputs keep an (8, 128)-aligned block (VPU-only ops)."""
    c = s.shape[-1]
    row = jax.lax.broadcasted_iota(jnp.int32, (8, c), 0)
    return jnp.where(row == 0, s, jnp.where(row == 1, q, 0.0))


# ----------------------------- Pallas kernels -------------------------------

def _bn_stats_kernel(x_ref, stats_ref):
    """Per-tile partial BN statistics; each M tile writes its own slab so the
    grid axis stays 'parallel'.  Zero-padded rows/channels contribute nothing."""
    x = x_ref[...].astype(jnp.float32)
    s = jnp.sum(x, axis=0, keepdims=True)
    q = jnp.sum(x * x, axis=0, keepdims=True)
    stats_ref[...] = _stats_slab(s, q)[None]


def _bn_apply_relu_kernel(x_ref, scale_ref, shift_ref, o_ref):
    """y = relu(x * scale + shift); elementwise math in f32 (v5e-safe)."""
    x = x_ref[...].astype(jnp.float32)
    o_ref[...] = jnp.maximum(x * scale_ref[...] + shift_ref[...], 0.0
                             ).astype(o_ref.dtype)


def _conv_matmul_kernel(a_ref, w_ref, o_ref, stats_ref):
    """h = patches @ w (single MXU dot per tile, VMEM-resident weights) with
    fused per-tile BN statistics of h for the following BatchNorm."""
    acc = jnp.dot(a_ref[...], w_ref[...], preferred_element_type=jnp.float32)
    o_ref[...] = acc.astype(o_ref.dtype)
    s = jnp.sum(acc, axis=0, keepdims=True)
    q = jnp.sum(acc * acc, axis=0, keepdims=True)
    stats_ref[...] = _stats_slab(s, q)[None]


def _make_conv_matmul_shortcut_kernel(cp):
    """Same as _conv_matmul_kernel plus the fused 1x1/stride shortcut conv:
    its input rows are exactly the centre (kh=1,kw=1) channel slice of the
    3x3 patch rows, so the already-resident A tile is reused."""
    def kernel(a_ref, w_ref, ws_ref, o_ref, sc_ref, stats_ref):
        acc = jnp.dot(a_ref[...], w_ref[...], preferred_element_type=jnp.float32)
        o_ref[...] = acc.astype(o_ref.dtype)
        s = jnp.sum(acc, axis=0, keepdims=True)
        q = jnp.sum(acc * acc, axis=0, keepdims=True)
        stats_ref[...] = _stats_slab(s, q)[None]
        centre = a_ref[:, 4 * cp:5 * cp]                  # static, lane-aligned
        sc_ref[...] = jnp.dot(centre, ws_ref[...],
                              preferred_element_type=jnp.float32
                              ).astype(sc_ref.dtype)
    return kernel


def _conv_matmul_residual_kernel(a_ref, w_ref, c_ref, o_ref):
    """y = patches @ w + residual (residual add fused, bf16 residual)."""
    acc = jnp.dot(a_ref[...], w_ref[...], preferred_element_type=jnp.float32)
    o_ref[...] = (acc + c_ref[...].astype(jnp.float32)).astype(o_ref.dtype)


# --------------------------- pallas_call wrappers ----------------------------

def bn_partial_stats(x2d, tm):
    """x2d: (M, Cp) channel-padded.  Returns (sum, sumsq), each (1, Cp) f32."""
    m, cp = x2d.shape
    mp = _round_up(m, tm)
    nt = mp // tm
    x_p = _pad2d(x2d, mp, cp)
    stats = pl.pallas_call(
        _bn_stats_kernel,
        grid_spec=pltpu.PrefetchScalarGridSpec(
            num_scalar_prefetch=0,
            grid=(nt,),
            in_specs=[pl.BlockSpec((tm, cp), lambda i: (i, 0))],
            out_specs=pl.BlockSpec((1, 8, cp), lambda i: (i, 0, 0))),
        out_shape=jax.ShapeDtypeStruct((nt, 8, cp), jnp.float32),
        compiler_params=_compiler_params(("parallel",)),
    )(x_p)
    return (jnp.sum(stats[:, 0, :], axis=0, keepdims=True),
            jnp.sum(stats[:, 1, :], axis=0, keepdims=True))


def bn_finalize(sums, sqs, gamma, beta, m_true, cp):
    """Tiny per-channel finalize: batch stats -> (scale, shift), padded to Cp."""
    mean = sums / m_true
    var = jnp.maximum(sqs / m_true - mean * mean, 0.0)   # biased var (fwd)
    g = _pad2d(gamma.reshape(1, -1).astype(jnp.float32), 1, cp)
    b = _pad2d(beta.reshape(1, -1).astype(jnp.float32), 1, cp)
    scale = g * jax.lax.rsqrt(var + EPS)
    shift = b - mean * scale
    return scale, shift


def bn_apply_relu(x2d, scale, shift, tm, out_dtype=jnp.bfloat16):
    m, cp = x2d.shape
    mp = _round_up(m, tm)
    x_p = _pad2d(x2d, mp, cp)
    out = pl.pallas_call(
        _bn_apply_relu_kernel,
        grid_spec=pltpu.PrefetchScalarGridSpec(
            num_scalar_prefetch=0,
            grid=(mp // tm,),
            in_specs=[pl.BlockSpec((tm, cp), lambda i: (i, 0)),
                      pl.BlockSpec((1, cp), lambda i: (0, 0)),
                      pl.BlockSpec((1, cp), lambda i: (0, 0))],
            out_specs=pl.BlockSpec((tm, cp), lambda i: (i, 0))),
        out_shape=jax.ShapeDtypeStruct((mp, cp), out_dtype),
        compiler_params=_compiler_params(("parallel",)),
    )(x_p, scale, shift)
    return out if mp == m else out[:m]


def conv_matmul_fused(patches, w, ws=None, out_dtype=jnp.bfloat16):
    """conv1: h = patches @ w, fused BN2 statistics, optional fused shortcut.
    Returns (h (M,Np), shortcut or None (M,Np), sum (1,Np), sumsq (1,Np))."""
    m, kp = patches.shape
    np_ = w.shape[1]
    cp = kp // 9
    tm = _pick_tile_m_matmul(m, kp, np_, out_bytes=2, residual=False,
                             shortcut_cp=(cp if ws is not None else 0))
    mp = _round_up(m, tm)
    nt = mp // tm
    a_p = _pad2d(patches, mp, kp)

    in_specs = [pl.BlockSpec((tm, kp), lambda i: (i, 0)),
                pl.BlockSpec((kp, np_), lambda i: (0, 0))]     # resident weights
    operands = [a_p, w]
    out_specs = [pl.BlockSpec((tm, np_), lambda i: (i, 0))]
    out_shape = [jax.ShapeDtypeStruct((mp, np_), out_dtype)]
    if ws is not None:
        in_specs.append(pl.BlockSpec((cp, np_), lambda i: (0, 0)))
        operands.append(ws)
        out_specs.append(pl.BlockSpec((tm, np_), lambda i: (i, 0)))
        out_shape.append(jax.ShapeDtypeStruct((mp, np_), out_dtype))
        kernel = _make_conv_matmul_shortcut_kernel(cp)
    else:
        kernel = _conv_matmul_kernel
    out_specs.append(pl.BlockSpec((1, 8, np_), lambda i: (i, 0, 0)))
    out_shape.append(jax.ShapeDtypeStruct((nt, 8, np_), jnp.float32))

    outs = pl.pallas_call(
        kernel,
        grid_spec=pltpu.PrefetchScalarGridSpec(
            num_scalar_prefetch=0,
            grid=(nt,),
            in_specs=in_specs,
            out_specs=tuple(out_specs)),
        out_shape=tuple(out_shape),
        compiler_params=_compiler_params(("parallel",)),
    )(*operands)

    if ws is not None:
        h, sc, stats = outs
    else:
        (h, stats), sc = outs, None
    if mp != m:
        h = h[:m]
        sc = sc[:m] if sc is not None else None
    sums = jnp.sum(stats[:, 0, :], axis=0, keepdims=True)
    sqs = jnp.sum(stats[:, 1, :], axis=0, keepdims=True)
    return h, sc, sums, sqs


def conv_matmul_residual(patches, w, residual, out_dtype=jnp.float32):
    """conv2: y = patches @ w + residual (fused add)."""
    m, kp = patches.shape
    np_ = w.shape[1]
    tm = _pick_tile_m_matmul(m, kp, np_, out_bytes=4, residual=True,
                             shortcut_cp=0)
    mp = _round_up(m, tm)
    a_p = _pad2d(patches, mp, kp)
    c_p = _pad2d(residual, mp, np_)
    out = pl.pallas_call(
        _conv_matmul_residual_kernel,
        grid_spec=pltpu.PrefetchScalarGridSpec(
            num_scalar_prefetch=0,
            grid=(mp // tm,),
            in_specs=[pl.BlockSpec((tm, kp), lambda i: (i, 0)),
                      pl.BlockSpec((kp, np_), lambda i: (0, 0)),
                      pl.BlockSpec((tm, np_), lambda i: (i, 0))],
            out_specs=pl.BlockSpec((tm, np_), lambda i: (i, 0))),
        out_shape=jax.ShapeDtypeStruct((mp, np_), out_dtype),
        compiler_params=_compiler_params(("parallel",)),
    )(a_p, w, c_p)
    return out if mp == m else out[:m]


# -------------------------------- JAX glue -----------------------------------

def im2col_3x3(x_nhwc, stride):
    """3x3, padding=1 patches of a channel-padded NHWC activation.
    Column layout of the 9*C axis is (kh, kw, c) — matches the HWIO weights.
    TODO(synk): replace with an implicit-GEMM A load (shifted-window DMAs of
    the padded activation inside the matmul kernel) so the 9x patch matrix is
    never materialized in HBM."""
    n, h, w, c = x_nhwc.shape
    ho = (h + 2 - 3) // stride + 1
    wo = (w + 2 - 3) // stride + 1
    xp = jnp.pad(x_nhwc, ((0, 0), (1, 1), (1, 1), (0, 0)))
    cols = []
    for kh in range(3):
        for kw in range(3):
            sl = xp[:, kh:kh + (ho - 1) * stride + 1:stride,
                       kw:kw + (wo - 1) * stride + 1:stride, :]
            cols.append(sl)
    patches = jnp.concatenate(cols, axis=-1)            # (N, Ho, Wo, 9*C)
    return patches.reshape(n * ho * wo, 9 * c), ho, wo


def _prep_w3x3(w_oihw, cp, np_):
    co, ci = w_oihw.shape[:2]
    w = jnp.transpose(w_oihw, (2, 3, 1, 0))             # HWIO
    w = jnp.pad(w, ((0, 0), (0, 0), (0, cp - ci), (0, np_ - co)))
    return w.reshape(9 * cp, np_).astype(jnp.bfloat16)


def _prep_w1x1(w_oihw, cp, np_):
    co, ci = w_oihw.shape[:2]
    w = w_oihw.reshape(co, ci).T                        # (Cin, Cout)
    return _pad2d(w, cp, np_).astype(jnp.bfloat16)


def init_basic_block_params(key, in_planes, out_planes):
    """Deterministic synthetic parameters (same shapes as the nn.Module)."""
    k1, k2, k3, k4, k5 = jax.random.split(key, 5)
    params = {
        "bn1_gamma": 1.0 + 0.1 * jax.random.normal(k1, (in_planes,), jnp.float32),
        "bn1_beta": 0.1 * jax.random.normal(k2, (in_planes,), jnp.float32),
        "conv1_w": 0.1 * jax.random.normal(k3, (out_planes, in_planes, 3, 3), jnp.float32),
        "bn2_gamma": jnp.ones((out_planes,), jnp.float32),
        "bn2_beta": jnp.zeros((out_planes,), jnp.float32),
        "conv2_w": 0.1 * jax.random.normal(k4, (out_planes, out_planes, 3, 3), jnp.float32),
    }
    if in_planes != out_planes:
        params["convs_w"] = 0.1 * jax.random.normal(
            k5, (out_planes, in_planes, 1, 1), jnp.float32)
    return params


def basic_block_forward(x_nchw, params, stride):
    """Forward pass of BasicBlock (drop_rate = 0)."""
    n, cin, h, w = x_nchw.shape
    cout = params["conv1_w"].shape[0]
    is_equal = (cin == cout)
    if is_equal:
        # Identity shortcut adds the raw input; spatial dims must match.
        assert stride == 1, "identity shortcut requires stride == 1"

    cp_in = _round_up(cin, 128)
    cp_out = _round_up(cout, 128)

    # Channel-padded bf16 NHWC activations flow through the whole block.
    x = jnp.transpose(x_nchw, (0, 2, 3, 1))
    x = jnp.pad(x, ((0, 0), (0, 0), (0, 0), (0, cp_in - cin))).astype(jnp.bfloat16)
    m1 = n * h * w
    x2d = x.reshape(m1, cp_in)

    # --- bn1 + relu (two tiled passes; stats stay 'parallel' via partial rows)
    tm_bn1 = _pick_tile_m_elementwise(m1, cp_in)
    s1, q1 = bn_partial_stats(x2d, tm_bn1)
    scale1, shift1 = bn_finalize(s1, q1, params["bn1_gamma"],
                                 params["bn1_beta"], m1, cp_in)
    a1_2d = bn_apply_relu(x2d, scale1, shift1, tm_bn1)
    a1 = a1_2d.reshape(n, h, w, cp_in)

    # --- conv1 (3x3/stride) + fused BN2 statistics (+ fused 1x1 shortcut) ---
    p1, ho, wo = im2col_3x3(a1, stride)
    m2 = n * ho * wo
    w1 = _prep_w3x3(params["conv1_w"], cp_in, cp_out)
    ws = _prep_w1x1(params["convs_w"], cp_in, cp_out) if not is_equal else None
    h2d, sc2d, s2, q2 = conv_matmul_fused(p1, w1, ws)

    # --- bn2 + relu (stats already produced by the conv1 epilogue) ---
    scale2, shift2 = bn_finalize(s2, q2, params["bn2_gamma"],
                                 params["bn2_beta"], m2, cp_out)
    tm_bn2 = _pick_tile_m_elementwise(m2, cp_out)
    a2_2d = bn_apply_relu(h2d, scale2, shift2, tm_bn2)
    a2 = a2_2d.reshape(n, ho, wo, cp_out)

    # TODO(synk): F.dropout for drop_rate > 0 not implemented (default 0.0).

    # --- conv2 (3x3/1) + residual add fused into the epilogue ---
    p2, _, _ = im2col_3x3(a2, 1)
    w2 = _prep_w3x3(params["conv2_w"], cp_out, cp_out)
    residual = x2d if is_equal else sc2d                 # bf16, channel-padded
    y2d = conv_matmul_residual(p2, w2, residual)

    y = y2d[:, :cout].reshape(n, ho, wo, cout)
    return jnp.transpose(y, (0, 3, 1, 2)).astype(jnp.float32)   # back to NCHW


# ------------------------- pure-JAX reference (f32) --------------------------

def _reference_forward(x_nchw, params, stride):
    def bn(x, gamma, beta):
        mean = jnp.mean(x, axis=(0, 2, 3), keepdims=True)
        var = jnp.mean((x - mean) ** 2, axis=(0, 2, 3), keepdims=True)
        return ((x - mean) * jax.lax.rsqrt(var + EPS)
                * gamma.reshape(1, -1, 1, 1) + beta.reshape(1, -1, 1, 1))

    def conv(x, w, s, p):
        return jax.lax.conv_general_dilated(
            x, w, (s, s), [(p, p), (p, p)],
            dimension_numbers=("NCHW", "OIHW", "NCHW"),
            precision=jax.lax.Precision.HIGHEST)

    a1 = jax.nn.relu(bn(x_nchw, params["bn1_gamma"], params["bn1_beta"]))
    h = conv(a1, params["conv1_w"], stride, 1)
    a2 = jax.nn.relu(bn(h, params["bn2_gamma"], params["bn2_beta"]))
    out = conv(a2, params["conv2_w"], 1, 1)
    sc = conv(a1, params["convs_w"], stride, 0) if "convs_w" in params else x_nchw
    return out + sc


# ----------------------------------- main ------------------------------------

if __name__ == "__main__":
    key = jax.random.PRNGKey(0)
    kx1, kx2, kp1, kp2 = jax.random.split(key, 4)

    # Case 1: in_planes != out_planes, stride=2 (fused conv_shortcut branch)
    x1 = jax.random.normal(kx1, (2, 4, 16, 16), jnp.float32)
    params1 = init_basic_block_params(kp1, in_planes=4, out_planes=8)
    y1 = basic_block_forward(x1, params1, stride=2)
    jax.block_until_ready(y1)
    assert y1.shape == (2, 8, 8, 8), y1.shape
    ref1 = _reference_forward(x1, params1, stride=2)
    err1 = float(jnp.max(jnp.abs(y1 - ref1)))
    tol1 = 5e-2 * float(jnp.max(jnp.abs(ref1))) + 5e-2
    assert err1 < tol1, (err1, tol1)

    # Case 2: in_planes == out_planes, stride=1 (identity shortcut branch)
    x2 = jax.random.normal(kx2, (2, 8, 16, 16), jnp.float32)
    params2 = init_basic_block_params(kp2, in_planes=8, out_planes=8)
    y2 = basic_block_forward(x2, params2, stride=1)
    jax.block_until_ready(y2)
    assert y2.shape == (2, 8, 16, 16), y2.shape
    ref2 = _reference_forward(x2, params2, stride=1)
    err2 = float(jnp.max(jnp.abs(y2 - ref2)))
    tol2 = 5e-2 * float(jnp.max(jnp.abs(ref2))) + 5e-2
    assert err2 < tol2, (err2, tol2)

    print("KERNEL_OK")
</pallas_src>

<mosaic_0001>
module attributes {stable_mosaic.version = 11 : i64} {
  func.func @_bn_stats_kernel(%arg0: i32, %arg1: memref<512x128xbf16, #tpu.memory_space<vmem>>, %arg2: memref<1x8x128xf32, #tpu.memory_space<vmem>>) attributes {dimension_semantics = [#tpu.dimension_semantics<parallel>], iteration_bounds = array<i64: 1>, scalar_prefetch = 0 : i64, scratch_operands = 0 : i64, tpu.core_type = #tpu.core_type<tc>, window_params = [{transform_indices = @transform_0, window_bounds = array<i64: 512, 128>}, {transform_indices = @transform_1, window_bounds = array<i64: 1, 8, 128>}]} {
    %c0 = arith.constant 0 : index
    %c0_0 = arith.constant 0 : index
    %0 = vector.load %arg1[%c0, %c0_0] : memref<512x128xbf16, #tpu.memory_space<vmem>>, vector<512x128xbf16>
    %1 = arith.extf %0 : vector<512x128xbf16> to vector<512x128xf32>
    %cst = arith.constant dense<0.000000e+00> : vector<128xf32>
    %2 = vector.multi_reduction <add>, %1, %cst [0] : vector<512x128xf32> to vector<128xf32>
    %3 = vector.shape_cast %2 : vector<128xf32> to vector<1x128xf32>
    %4 = arith.mulf %1, %1 : vector<512x128xf32>
    %cst_1 = arith.constant dense<0.000000e+00> : vector<128xf32>
    %5 = vector.multi_reduction <add>, %4, %cst_1 [0] : vector<512x128xf32> to vector<128xf32>
    %6 = vector.shape_cast %5 : vector<128xf32> to vector<1x128xf32>
    %7 = tpu.iota {dimensions = array<i32: 0>} : vector<8x128xi32>
    %c0_i32 = arith.constant 0 : i32
    %8 = vector.broadcast %c0_i32 : i32 to vector<8x128xi32>
    %9 = arith.cmpi eq, %7, %8 : vector<8x128xi32>
    %c1_i32 = arith.constant 1 : i32
    %10 = vector.broadcast %c1_i32 : i32 to vector<8x128xi32>
    %11 = arith.cmpi eq, %7, %10 : vector<8x128xi32>
    %cst_2 = arith.constant 0.000000e+00 : f32
    %12 = vector.shape_cast %6 : vector<1x128xf32> to vector<1x128xf32>
    %13 = vector.broadcast %12 : vector<1x128xf32> to vector<8x128xf32>
    %14 = vector.broadcast %cst_2 : f32 to vector<8x128xf32>
    %15 = arith.select %11, %13, %14 : vector<8x128xi1>, vector<8x128xf32>
    %16 = vector.shape_cast %3 : vector<1x128xf32> to vector<1x128xf32>
    %17 = vector.broadcast %16 : vector<1x128xf32> to vector<8x128xf32>
    %18 = arith.select %9, %17, %15 : vector<8x128xi1>, vector<8x128xf32>
    %19 = vector.shape_cast %18 : vector<8x128xf32> to vector<1x8x128xf32>
    %c0_3 = arith.constant 0 : index
    %c0_4 = arith.constant 0 : index
    %c0_5 = arith.constant 0 : index
    %20 = vector.load %arg2[%c0_3, %c0_4, %c0_5] : memref<1x8x128xf32, #tpu.memory_space<vmem>>, vector<1x8x128xf32>
    tpu.vector_store %arg2[%c0_3, %c0_4, %c0_5], %19 {strides = array<i32>} : memref<1x8x128xf32, #tpu.memory_space<vmem>>, vector<1x8x128xf32>,
    return
  }
  func.func @transform_0(%arg0: i32) -> (i32, i32) {
    %c0_i32 = arith.constant 0 : i32
    %c0_i32_0 = arith.constant 0 : i32
    return %arg0, %c0_i32 : i32, i32
  }
  func.func @transform_1(%arg0: i32) -> (i32, i32, i32) {
    %c0_i32 = arith.constant 0 : i32
    %c0_i32_0 = arith.constant 0 : i32
    %c0_i32_1 = arith.constant 0 : i32
    return %arg0, %c0_i32, %c0_i32_0 : i32, i32, i32
  }
}

</mosaic_0001>

<llo_original>
// kernel: tpu_custom_call.1
$region0: #{tpu_custom_call.1}
  #allocation0 [shape = 'u32[]', space=smem, size = 0x4, offset = 0x4, fixed_abs, tag = 'smem constant byte address 0x4 - core index']
  #allocation1 [shape = 'u32[144,128]{1,0:T(1,128)}', space=vmem, size = 0x12000, scoped, tag = 'internal scratch']
  %s0 = inlined_call_operand.hbm [shape: bf16[512,128], index: 0, kind: input, shape index: {}]
  %s1 = inlined_call_operand.hbm [shape: f32[1,8,128], index: 1, kind: output, shape index: {}]
  %s2 = sld [smem:[#allocation0]]
  $region18: #{tpu_custom_call.1} parent=0
    _
  %s4 = ssub.s32 1, %s2
  %s5 = scalar_select 0, %s4, %s2
  $region1: #{tpu_custom_call.1} parent=0
    #allocation2 [shape = 'u8[131072]{0}', space=vmem, size = 0x20000, scoped, tag = 'input window, operand 0, single buffered']
    #allocation3 [shape = 's32[1]{0}', space=sflag, size = 0x4, scoped, tag = 'scoped memory for tpu_custom_call.1']
    #allocation4 [shape = 's32[1]{0}', space=sflag, size = 0x4, scoped, tag = 'scoped memory for tpu_custom_call.1']
    #allocation5 [shape = 'u8[4096]{0}', space=vmem, size = 0x1000, scoped, tag = 'output window, operand 0, single buffered']
    %6 = vsyncpa [#allocation3], 0
    %7 = vsyncpa [#allocation4], 0
    // Predicated region
    $region2: #{tpu_custom_call.1} parent=1 // pred_check
      _
    $region3: #{tpu_custom_call.1} parent=1 // pred_check_branch
      %9 = sbr.rel (0) target = $region5
    $region4: #{tpu_custom_call.1} parent=1 // pred_region
      %s11 = ssub.s32 4096, 4096
      %12 = vsyncadd [#allocation3], %s11
      %s13 = sshll.u32 [#allocation2], 4
      %s14 = int_to_ptr.vmem [resolvable:$true] %s13
      %19 = dma.hbm_to_vmem [thread:$0]  %s0, 4096, %s14, [#allocation3], 64, 64, 4
    $region5: #{tpu_custom_call.1} parent=1 // pred_fallthru
      _
    // Predicated region
    $region6: #{tpu_custom_call.1} parent=1 // pred_check
      _
    $region7: #{tpu_custom_call.1} parent=1 // pred_check_branch
      %21 = sbr.rel (0) target = $region9
    $region8: #{tpu_custom_call.1} parent=1 // pred_region
      %22 = dma.done [#allocation3], 4096
    $region9: #{tpu_custom_call.1} parent=1 // pred_fallthru
      _
    %v23 = vld [vmem:[#allocation2] sm:$0xf]
    %v24 = vld [vmem:[#allocation2 + $0x4] sm:$0xf]
    %v25 = vld [vmem:[#allocation2 + $0x8] sm:$0xf]
    %v26 = vld [vmem:[#allocation2 + $0xc] sm:$0xf]
    %v27 = vld [vmem:[#allocation2 + $0x10] sm:$0xf]
    %v28 = vld [vmem:[#allocation2 + $0x14] sm:$0xf]
    %v29 = vld [vmem:[#allocation2 + $0x18] sm:$0xf]
    %v30 = vld [vmem:[#allocation2 + $0x1c] sm:$0xf]
    %v31 = vld [vmem:[#allocation2 + $0x20] sm:$0xf]
    %v32 = vld [vmem:[#allocation2 + $0x24] sm:$0xf]
    %v33 = vld [vmem:[#allocation2 + $0x28] sm:$0xf]
    %v34 = vld [vmem:[#allocation2 + $0x2c] sm:$0xf]
    %v35 = vld [vmem:[#allocation2 + $0x30] sm:$0xf]
    %v36 = vld [vmem:[#allocation2 + $0x34] sm:$0xf]
    %v37 = vld [vmem:[#allocation2 + $0x38] sm:$0xf]
    %v38 = vld [vmem:[#allocation2 + $0x3c] sm:$0xf]
    %v39 = vld [vmem:[#allocation2 + $0x40] sm:$0xf]
    %v40 = vld [vmem:[#allocation2 + $0x44] sm:$0xf]
    %v41 = vld [vmem:[#allocation2 + $0x48] sm:$0xf]
    %v42 = vld [vmem:[#allocation2 + $0x4c] sm:$0xf]
    %v43 = vld [vmem:[#allocation2 + $0x50] sm:$0xf]
    %v44 = vld [vmem:[#allocation2 + $0x54] sm:$0xf]
    %v45 = vld [vmem:[#allocation2 + $0x58] sm:$0xf]
    %v46 = vld [vmem:[#allocation2 + $0x5c] sm:$0xf]
    %v47 = vld [vmem:[#allocation2 + $0x60] sm:$0xf]
    %v48 = vld [vmem:[#allocation2 + $0x64] sm:$0xf]
    %v49 = vld [vmem:[#allocation2 + $0x68] sm:$0xf]
    %v50 = vld [vmem:[#allocation2 + $0x6c] sm:$0xf]
    %v51 = vld [vmem:[#allocation2 + $0x70] sm:$0xf]
    %v52 = vld [vmem:[#allocation2 + $0x74] sm:$0xf]
    %v53 = vld [vmem:[#allocation2 + $0x78] sm:$0xf]
    %v54 = vld [vmem:[#allocation2 + $0x7c] sm:$0xf]
    %v55 = vld [vmem:[#allocation2 + $0x80] sm:$0xf]
    %v56 = vld [vmem:[#allocation2 + $0x84] sm:$0xf]
    %v57 = vld [vmem:[#allocation2 + $0x88] sm:$0xf]
    %v58 = vld [vmem:[#allocation2 + $0x8c] sm:$0xf]
    %v59 = vld [vmem:[#allocation2 + $0x90] sm:$0xf]
    %v60 = vld [vmem:[#allocation2 + $0x94] sm:$0xf]
    %v61 = vld [vmem:[#allocation2 + $0x98] sm:$0xf]
    %v62 = vld [vmem:[#allocation2 + $0x9c] sm:$0xf]
    %v63 = vld [vmem:[#allocation2 + $0xa0] sm:$0xf]
    %v64 = vld [vmem:[#allocation2 + $0xa4] sm:$0xf]
    %v65 = vld [vmem:[#allocation2 + $0xa8] sm:$0xf]
    %v66 = vld [vmem:[#allocation2 + $0xac] sm:$0xf]
    %v67 = vld [vmem:[#allocation2 + $0xb0] sm:$0xf]
    %v68 = vld [vmem:[#allocation2 + $0xb4] sm:$0xf]
    %v69 = vld [vmem:[#allocation2 + $0xb8] sm:$0xf]
    %v70 = vld [vmem:[#allocation2 + $0xbc] sm:$0xf]
    %v71 = vld [vmem:[#allocation2 + $0xc0] sm:$0xf]
    %v72 = vld [vmem:[#allocation2 + $0xc4] sm:$0xf]
    %v73 = vld [vmem:[#allocation2 + $0xc8] sm:$0xf]
    %v74 = vld [vmem:[#allocation2 + $0xcc] sm:$0xf]
    %v75 = vld [vmem:[#allocation2 + $0xd0] sm:$0xf]
    %v76 = vld [vmem:[#allocation2 + $0xd4] sm:$0xf]
    %v77 = vld [vmem:[#allocation2 + $0xd8] sm:$0xf]
    %v78 = vld [vmem:[#allocation2 + $0xdc] sm:$0xf]
    %v79 = vld [vmem:[#allocation2 + $0xe0] sm:$0xf]
    %v80 = vld [vmem:[#allocation2 + $0xe4] sm:$0xf]
    %v81 = vld [vmem:[#allocation2 + $0xe8] sm:$0xf]
    %v82 = vld [vmem:[#allocation2 + $0xec] sm:$0xf]
    %v83 = vld [vmem:[#allocation2 + $0xf0] sm:$0xf]
    %v84 = vld [vmem:[#allocation2 + $0xf4] sm:$0xf]
    %v85 = vld [vmem:[#allocation2 + $0xf8] sm:$0xf]
    %v86 = vld [vmem:[#allocation2 + $0xfc] sm:$0xf]
    %v87 = vunpack.c.l.bf16 %v23
    %v88 = vunpack.c.l.bf16 %v24
    %v89 = vunpack.c.l.bf16 %v25
    %v90 = vunpack.c.l.bf16 %v26
    %v91 = vunpack.c.l.bf16 %v27
    %v92 = vunpack.c.l.bf16 %v28
    %v93 = vunpack.c.l.bf16 %v29
    %v94 = vunpack.c.l.bf16 %v30
    %v95 = vunpack.c.l.bf16 %v31
    %v96 = vunpack.c.l.bf16 %v32
    %v97 = vunpack.c.l.bf16 %v33
    %v98 = vunpack.c.l.bf16 %v34
    %v99 = vunpack.c.l.bf16 %v35
    %v100 = vunpack.c.l.bf16 %v36
    %v101 = vunpack.c.l.bf16 %v37
    %v102 = vunpack.c.l.bf16 %v38
    %v103 = vunpack.c.l.bf16 %v39
    %v104 = vunpack.c.l.bf16 %v40
    %v105 = vunpack.c.l.bf16 %v41
    %v106 = vunpack.c.l.bf16 %v42
    %v107 = vunpack.c.l.bf16 %v43
    %v108 = vunpack.c.l.bf16 %v44
    %v109 = vunpack.c.l.bf16 %v45
    %v110 = vunpack.c.l.bf16 %v46
    %v111 = vunpack.c.l.bf16 %v47
    %v112 = vunpack.c.l.bf16 %v48
    %v113 = vunpack.c.l.bf16 %v49
    %v114 = vunpack.c.l.bf16 %v50
    %v115 = vunpack.c.l.bf16 %v51
    %v116 = vunpack.c.l.bf16 %v52
    %v117 = vunpack.c.l.bf16 %v53
    %v118 = vunpack.c.l.bf16 %v54
    %v119 = vunpack.c.l.bf16 %v55
    %v120 = vunpack.c.l.bf16 %v56
    %v121 = vunpack.c.l.bf16 %v57
    %v122 = vunpack.c.l.bf16 %v58
    %v123 = vunpack.c.l.bf16 %v59
    %v124 = vunpack.c.l.bf16 %v60
    %v125 = vunpack.c.l.bf16 %v61
    %v126 = vunpack.c.l.bf16 %v62
    %v127 = vunpack.c.l.bf16 %v63
    %v128 = vunpack.c.l.bf16 %v64
    %v129 = vunpack.c.l.bf16 %v65
    %v130 = vunpack.c.l.bf16 %v66
    %v131 = vunpack.c.l.bf16 %v67
    %v132 = vunpack.c.l.bf16 %v68
    %v133 = vunpack.c.l.bf16 %v69
    %v134 = vunpack.c.l.bf16 %v70
    %v135 = vunpack.c.l.bf16 %v71
    %v136 = vunpack.c.l.bf16 %v72
    %v137 = vunpack.c.l.bf16 %v73
    %v138 = vunpack.c.l.bf16 %v74
    %v139 = vunpack.c.l.bf16 %v75
    %v140 = vunpack.c.l.bf16 %v76
    %v141 = vunpack.c.l.bf16 %v77
    %v142 = vunpack.c.l.bf16 %v78
    %v143 = vunpack.c.l.bf16 %v79
    %v144 = vunpack.c.l.bf16 %v80
    %v145 = vunpack.c.l.bf16 %v81
    %v146 = vunpack.c.l.bf16 %v82
    %v147 = vunpack.c.l.bf16 %v83
    %v148 = vunpack.c.l.bf16 %v84
    %v149 = vunpack.c.l.bf16 %v85
    %v150 = vunpack.c.l.bf16 %v86
    %v151 = vadd.f32 %v87, %v88
    %v152 = vadd.f32 %v151, %v89
    %v153 = vadd.f32 %v152, %v90
    %v154 = vadd.f32 %v153, %v91
    %v155 = vadd.f32 %v154, %v92
    %v156 = vadd.f32 %v155, %v93
    %v157 = vadd.f32 %v156, %v94
    %v158 = vadd.f32 %v157, %v95
    %v159 = vadd.f32 %v158, %v96
    %v160 = vadd.f32 %v159, %v97
    %v161 = vadd.f32 %v160, %v98
    %v162 = vadd.f32 %v161, %v99
    %v163 = vadd.f32 %v162, %v100
    %v164 = vadd.f32 %v163, %v101
    %v165 = vadd.f32 %v164, %v102
    %v166 = vadd.f32 %v165, %v103
    %v167 = vadd.f32 %v166, %v104
    %v168 = vadd.f32 %v167, %v105
    %v169 = vadd.f32 %v168, %v106
    %v170 = vadd.f32 %v169, %v107
    %v171 = vadd.f32 %v170, %v108
    %v172 = vadd.f32 %v171, %v109
    %v173 = vadd.f32 %v172, %v110
    %v174 = vadd.f32 %v173, %v111
    %v175 = vadd.f32 %v174, %v112
    %v176 = vadd.f32 %v175, %v113
    %v177 = vadd.f32 %v176, %v114
    %v178 = vadd.f32 %v177, %v115
    %v179 = vadd.f32 %v178, %v116
    %v180 = vadd.f32 %v179, %v117
    %v181 = vadd.f32 %v180, %v118
    %v182 = vadd.f32 %v181, %v119
    %v183 = vadd.f32 %v182, %v120
    %v184 = vadd.f32 %v183, %v121
    %v185 = vadd.f32 %v184, %v122
    %v186 = vadd.f32 %v185, %v123
    %v187 = vadd.f32 %v186, %v124
    %v188 = vadd.f32 %v187, %v125
    %v189 = vadd.f32 %v188, %v126
    %v190 = vadd.f32 %v189, %v127
    %v191 = vadd.f32 %v190, %v128
    %v192 = vadd.f32 %v191, %v129
    %v193 = vadd.f32 %v192, %v130
    %v194 = vadd.f32 %v193, %v131
    %v195 = vadd.f32 %v194, %v132
    %v196 = vadd.f32 %v195, %v133
    %v197 = vadd.f32 %v196, %v134
    %v198 = vadd.f32 %v197, %v135
    %v199 = vadd.f32 %v198, %v136
    %v200 = vadd.f32 %v199, %v137
    %v201 = vadd.f32 %v200, %v138
    %v202 = vadd.f32 %v201, %v139
    %v203 = vadd.f32 %v202, %v140
    %v204 = vadd.f32 %v203, %v141
    %v205 = vadd.f32 %v204, %v142
    %v206 = vadd.f32 %v205, %v143
    %v207 = vadd.f32 %v206, %v144
    %v208 = vadd.f32 %v207, %v145
    %v209 = vadd.f32 %v208, %v146
    %v210 = vadd.f32 %v209, %v147
    %v211 = vadd.f32 %v210, %v148
    %v212 = vadd.f32 %v211, %v149
    %v213 = vadd.f32 %v212, %v150
    %v214 = vrot.slane %v213, 4
    %v215 = vadd.f32 %v213, %v214
    %v216 = vrot.slane %v215, 2
    %v217 = vadd.f32 %v215, %v216
    %v218 = vrot.slane %v217, 1
    %v219 = vadd.f32 %v217, %v218
    %v220 = vmul.f32 %v87, %v87
    %v221 = vmul.f32 %v88, %v88
    %v222 = vmul.f32 %v89, %v89
    %v223 = vmul.f32 %v90, %v90
    %v224 = vmul.f32 %v91, %v91
    %v225 = vmul.f32 %v92, %v92
    %v226 = vmul.f32 %v93, %v93
    %v227 = vmul.f32 %v94, %v94
    %v228 = vmul.f32 %v95, %v95
    %v229 = vmul.f32 %v96, %v96
    %v230 = vmul.f32 %v97, %v97
    %v231 = vmul.f32 %v98, %v98
    %v232 = vmul.f32 %v99, %v99
    %v233 = vmul.f32 %v100, %v100
    %v234 = vmul.f32 %v101, %v101
    %v235 = vmul.f32 %v102, %v102
    %v236 = vmul.f32 %v103, %v103
    %v237 = vmul.f32 %v104, %v104
    %v238 = vmul.f32 %v105, %v105
    %v239 = vmul.f32 %v106, %v106
    %v240 = vmul.f32 %v107, %v107
    %v241 = vmul.f32 %v108, %v108
    %v242 = vmul.f32 %v109, %v109
    %v243 = vmul.f32 %v110, %v110
    %v244 = vmul.f32 %v111, %v111
    %v245 = vmul.f32 %v112, %v112
    %v246 = vmul.f32 %v113, %v113
    %v247 = vmul.f32 %v114, %v114
    %v248 = vmul.f32 %v115, %v115
    %v249 = vmul.f32 %v116, %v116
    %v250 = vmul.f32 %v117, %v117
    %v251 = vmul.f32 %v118, %v118
    %v252 = vmul.f32 %v119, %v119
    %v253 = vmul.f32 %v120, %v120
    %v254 = vmul.f32 %v121, %v121
    %v255 = vmul.f32 %v122, %v122
    %v256 = vmul.f32 %v123, %v123
    %v257 = vmul.f32 %v124, %v124
    %v258 = vmul.f32 %v125, %v125
    %v259 = vmul.f32 %v126, %v126
    %v260 = vmul.f32 %v127, %v127
    %v261 = vmul.f32 %v128, %v128
    %v262 = vmul.f32 %v129, %v129
    %v263 = vmul.f32 %v130, %v130
    %v264 = vmul.f32 %v131, %v131
    %v265 = vmul.f32 %v132, %v132
    %v266 = vmul.f32 %v133, %v133
    %v267 = vmul.f32 %v134, %v134
    %v268 = vmul.f32 %v135, %v135
    %v269 = vmul.f32 %v136, %v136
    %v270 = vmul.f32 %v137, %v137
    %v271 = vmul.f32 %v138, %v138
    %v272 = vmul.f32 %v139, %v139
    %v273 = vmul.f32 %v140, %v140
    %v274 = vmul.f32 %v141, %v141
    %v275 = vmul.f32 %v142, %v142
    %v276 = vmul.f32 %v143, %v143
    %v277 = vmul.f32 %v144, %v144
    %v278 = vmul.f32 %v145, %v145
    %v279 = vmul.f32 %v146, %v146
    %v280 = vmul.f32 %v147, %v147
    %v281 = vmul.f32 %v148, %v148
    %v282 = vmul.f32 %v149, %v149
    %v283 = vmul.f32 %v150, %v150
    %v284 = vadd.f32 %v220, %v221
    %v285 = vadd.f32 %v284, %v222
    %v286 = vadd.f32 %v285, %v223
    %v287 = vadd.f32 %v286, %v224
    %v288 = vadd.f32 %v287, %v225
    %v289 = vadd.f32 %v288, %v226
    %v290 = vadd.f32 %v289, %v227
    %v291 = vadd.f32 %v290, %v228
    %v292 = vadd.f32 %v291, %v229
    %v293 = vadd.f32 %v292, %v230
    %v294 = vadd.f32 %v293, %v231
    %v295 = vadd.f32 %v294, %v232
    %v296 = vadd.f32 %v295, %v233
    %v297 = vadd.f32 %v296, %v234
    %v298 = vadd.f32 %v297, %v235
    %v299 = vadd.f32 %v298, %v236
    %v300 = vadd.f32 %v299, %v237
    %v301 = vadd.f32 %v300, %v238
    %v302 = vadd.f32 %v301, %v239
    %v303 = vadd.f32 %v302, %v240
    %v304 = vadd.f32 %v303, %v241
    %v305 = vadd.f32 %v304, %v242
    %v306 = vadd.f32 %v305, %v243
    %v307 = vadd.f32 %v306, %v244
    %v308 = vadd.f32 %v307, %v245
    %v309 = vadd.f32 %v308, %v246
    %v310 = vadd.f32 %v309, %v247
    %v311 = vadd.f32 %v310, %v248
    %v312 = vadd.f32 %v311, %v249
    %v313 = vadd.f32 %v312, %v250
    %v314 = vadd.f32 %v313, %v251
    %v315 = vadd.f32 %v314, %v252
    %v316 = vadd.f32 %v315, %v253
    %v317 = vadd.f32 %v316, %v254
    %v318 = vadd.f32 %v317, %v255
    %v319 = vadd.f32 %v318, %v256
    %v320 = vadd.f32 %v319, %v257
    %v321 = vadd.f32 %v320, %v258
    %v322 = vadd.f32 %v321, %v259
    %v323 = vadd.f32 %v322, %v260
    %v324 = vadd.f32 %v323, %v261
    %v325 = vadd.f32 %v324, %v262
    %v326 = vadd.f32 %v325, %v263
    %v327 = vadd.f32 %v326, %v264
    %v328 = vadd.f32 %v327, %v265
    %v329 = vadd.f32 %v328, %v266
    %v330 = vadd.f32 %v329, %v267
    %v331 = vadd.f32 %v330, %v268
    %v332 = vadd.f32 %v331, %v269
    %v333 = vadd.f32 %v332, %v270
    %v334 = vadd.f32 %v333, %v271
    %v335 = vadd.f32 %v334, %v272
    %v336 = vadd.f32 %v335, %v273
    %v337 = vadd.f32 %v336, %v274
    %v338 = vadd.f32 %v337, %v275
    %v339 = vadd.f32 %v338, %v276
    %v340 = vadd.f32 %v339, %v277
    %v341 = vadd.f32 %v340, %v278
    %v342 = vadd.f32 %v341, %v279
    %v343 = vadd.f32 %v342, %v280
    %v344 = vadd.f32 %v343, %v281
    %v345 = vadd.f32 %v344, %v282
    %v346 = vadd.f32 %v345, %v283
    %v347 = vrot.slane %v346, 4
    %v348 = vadd.f32 %v346, %v347
    %v349 = vrot.slane %v348, 2
    %v350 = vadd.f32 %v348, %v349
    %v351 = vrot.slane %v350, 1
    %v352 = vadd.f32 %v350, %v351
    %v353 = vlaneseq
    %v354 = vshrl.u32 %v353, 7
    %vm355 = vcmp.eq.s32.totalorder %v354, 0
    %vm356 = vcmp.eq.s32.totalorder %v354, 1
    %v357 = vsel %vm356, %v352, 0.0
    %v358 = vsel %vm355, %v219, %v357
    %359 = vst [vmem:[#allocation5] sm:$0xff] %v358
    // Predicated region
    $region10: #{tpu_custom_call.1} parent=1 // pred_check
      _
    $region11: #{tpu_custom_call.1} parent=1 // pred_check_branch
      %361 = sbr.rel (0) target = $region13
    $region12: #{tpu_custom_call.1} parent=1 // pred_region
      %s363 = ssub.s32 128, 128
      %364 = vsyncadd [#allocation4], %s363
      %s366 = sshll.u32 [#allocation5], 4
      %s367 = int_to_ptr.vmem [resolvable:$true] %s366
      %369 = dma.vmem_to_hbm [thread:$0]  %s367, 128, %s1, [#allocation4]
    $region13: #{tpu_custom_call.1} parent=1 // pred_fallthru
      _
    // Predicated region
    $region14: #{tpu_custom_call.1} parent=1 // pred_check
      _
    $region15: #{tpu_custom_call.1} parent=1 // pred_check_branch
      %371 = sbr.rel (0) target = $region17
    $region16: #{tpu_custom_call.1} parent=1 // pred_region
      %372 = dma.done [#allocation4], 128
    $region17: #{tpu_custom_call.1} parent=1 // pred_fallthru
      _
    %373 = vsyncpa [#allocation3], 1
    %374 = vsyncpa [#allocation4], 1

</llo_original>
